<compile_context>
chip_gen: v6e
topology: v6e:2x2x1
jax: 0.10.0
libtpu: 0.0.40
codegen_flags: <defaults>
</compile_context>

<pallas_src>
import functools

import jax
import jax.numpy as jnp
import numpy as np
from jax.experimental import pallas as pl
from jax.experimental.pallas import tpu as pltpu


# ----------------------------------------------------------------------------
# Main kernel (grid over batch blocks, "parallel"):
#   packed tcn -> gcn -> mlp -> +residual, plus fused BN partial moments.
# ----------------------------------------------------------------------------
def _st_main_kernel(x_ref, mask_ref, ak_ref, wtap_ref, btap_ref,
                    wm_ref, bm_ref, y_ref, mom_ref, *, shifts, vt):
    C = x_ref.shape[0]
    L = x_ref.shape[1]                       # B * VT lanes (lane-dense)
    B = ak_ref.shape[0]
    x = x_ref[...]                           # (C, L) f32 -- also the residual

    # ---- shifted & masked tap stack (S*C, L), bf16 matmul operand ----------
    # out[:, i] = x[:, i + d]; the circular wrap / cross-node / cross-batch
    # lanes are exactly the ones the mask zeroes.  (Static lane rotation; a
    # pltpu.roll would run the same shuffle on the XLU slot.)
    rows = []
    for i, d in enumerate(shifts):           # static python ints
        if d == 0:
            r = x
        else:
            s = d % L
            r = jnp.concatenate([x[:, s:], x[:, :s]], axis=1) * mask_ref[i]
        rows.append(r.astype(jnp.bfloat16))
    xstack = jnp.concatenate(rows, axis=0)                       # (S*C, L)

    # ---- temporal conv: ONE MXU matmul for all branches/taps/filter&gate ---
    fg = jnp.dot(wtap_ref[...], xstack,
                 preferred_element_type=jnp.float32) + btap_ref[...]
    h0 = jnp.tanh(fg[:C]) * jax.nn.sigmoid(fg[C:])               # (C, L) f32
    h0b = h0.astype(jnp.bfloat16)

    # ---- graph conv: two hops h @ kron(A_n, I_T), per batch element --------
    h1_parts, h2_parts = [], []
    for b in range(B):                        # static, B small
        akb = ak_ref[b]                       # (VT, VT) bf16
        h0bb = h0b[:, b * vt:(b + 1) * vt]    # 128-aligned static lane slice
        h1bb = jnp.dot(h0bb, akb, preferred_element_type=jnp.float32)
        h1bb = h1bb.astype(jnp.bfloat16)
        h2bb = jnp.dot(h1bb, akb, preferred_element_type=jnp.float32)
        h1_parts.append(h1bb)
        h2_parts.append(h2bb.astype(jnp.bfloat16))
    h1b = h1_parts[0] if B == 1 else jnp.concatenate(h1_parts, axis=1)
    h2b = h2_parts[0] if B == 1 else jnp.concatenate(h2_parts, axis=1)

    # ---- 1x1 mlp: single (C,3C)@(3C,L) matmul + bias + residual (f32) ------
    hcat = jnp.concatenate([h0b, h1b, h2b], axis=0)              # (3C, L)
    y = jnp.dot(wm_ref[...], hcat, preferred_element_type=jnp.float32)
    # TODO(synk): F.dropout in gcn.forward is stochastic; treated as identity.
    y = y + bm_ref[...] + x

    y_ref[...] = y
    # fused per-step BatchNorm partial moments [sum | sumsq] (reduced outside)
    mom_ref[0] = jnp.concatenate(
        [jnp.sum(y, axis=1, keepdims=True),
         jnp.sum(y * y, axis=1, keepdims=True)], axis=1)         # (C, 2)


# ----------------------------------------------------------------------------
# Wrapper
# ----------------------------------------------------------------------------
def en_stblock_forward(x, adj, params, kernel_list, eps=1e-5, block_batch=None):
    N, C, V, T = x.shape
    VT = V * T
    Cs = C // len(kernel_list)

    lps = [(k - 1) // 2 for k in kernel_list]      # PyTorch padding='same'
    rps = [(k - 1) - lp for k, lp in zip(kernel_list, lps)]
    max_lp, max_rp = max(lps), max(rps)
    S = max_lp + max_rp + 1
    shifts = tuple(range(-max_lp, max_rp + 1))

    # batch elements per grid step (largest divisor of N up to 8)
    if block_batch is None:
        block_batch = next(b for b in range(min(N, 8), 0, -1) if N % b == 0)
    B = block_batch
    G = N // B
    L = B * VT
    # TODO(synk): on v7x with tiny N (G==1) both TensorCores only get work if a
    # second "parallel" lane axis is added; not needed at these sizes.

    # --- host-side glue (all tiny) -------------------------------------------
    # lane-dense (C, N*VT) slab: channels on sublanes, (batch,node,time) lanes
    xf = jnp.transpose(x.astype(jnp.float32), (1, 0, 2, 3)).reshape(C, N * VT)

    # per-shift validity mask: zero where a tap crosses a node/time boundary
    t_idx = np.arange(L) % T
    masks = np.stack([((t_idx + d >= 0) & (t_idx + d < T)).astype(np.float32)
                      for d in shifts])[:, None, :]              # (S, 1, L)
    masks = jnp.asarray(masks)

    # pack all temporal taps into a single (2C, S*C) bf16 weight + f32 bias
    wtap_np = np.zeros((2 * C, S * C), np.float32)
    btap_np = np.zeros((2 * C, 1), np.float32)
    for bidx, ((wf, bf, wg, bg), k) in enumerate(zip(params['tcn'], kernel_list)):
        lp = (k - 1) // 2
        r = bidx * Cs
        btap_np[r:r + Cs, 0] = np.asarray(bf)
        btap_np[C + r:C + r + Cs, 0] = np.asarray(bg)
        wf_np, wg_np = np.asarray(wf), np.asarray(wg)
        for j in range(k):
            s = j - lp + max_lp                    # shift slot for this tap
            wtap_np[r:r + Cs, s * C:(s + 1) * C] = wf_np[:, :, j]
            wtap_np[C + r:C + r + Cs, s * C:(s + 1) * C] = wg_np[:, :, j]
    wtap = jnp.asarray(wtap_np, dtype=jnp.bfloat16)
    btap = jnp.asarray(btap_np)

    wm, bm = params['mlp']
    wm_b = wm.astype(jnp.bfloat16)                 # (C, 3C)
    bm2 = bm.reshape(C, 1).astype(jnp.float32)

    # kron(A, I_T) keeps each graph hop a dense (C,VT)@(VT,VT) MXU matmul.
    # TODO(synk): for large V*T switch to the (C*T,V)@(V,V) contraction form;
    # kron inflates hop FLOPs and ak bytes by a factor of T.
    eye_t = jnp.eye(T, dtype=jnp.float32)
    ak = jax.vmap(lambda a: jnp.kron(a, eye_t))(adj.astype(jnp.float32))
    ak = ak.astype(jnp.bfloat16)                   # (N, VT, VT)

    cparams = pltpu.CompilerParams(dimension_semantics=("parallel",))

    main = pl.pallas_call(
        functools.partial(_st_main_kernel, shifts=shifts, vt=VT),
        out_shape=(jax.ShapeDtypeStruct((C, N * VT), jnp.float32),
                   jax.ShapeDtypeStruct((G, C, 2), jnp.float32)),
        grid_spec=pltpu.PrefetchScalarGridSpec(
            num_scalar_prefetch=0,
            grid=(G,),
            in_specs=[pl.BlockSpec((C, L), lambda i: (0, i)),
                      pl.BlockSpec((S, 1, L), lambda i: (0, 0, 0)),
                      pl.BlockSpec((B, VT, VT), lambda i: (i, 0, 0)),
                      pl.BlockSpec((2 * C, S * C), lambda i: (0, 0)),
                      pl.BlockSpec((2 * C, 1), lambda i: (0, 0)),
                      pl.BlockSpec((C, 3 * C), lambda i: (0, 0)),
                      pl.BlockSpec((C, 1), lambda i: (0, 0))],
            out_specs=(pl.BlockSpec((C, L), lambda i: (0, i)),
                       pl.BlockSpec((1, C, 2), lambda i: (i, 0, 0)))),
        compiler_params=cparams,
    )
    y, mom = main(xf, masks, ak, wtap, btap, wm_b, bm2)

    # --- BatchNorm2d (training-mode batch statistics, biased variance) ------
    # tiny XLA reduce of the per-step moment partials; affine apply fuses in
    # XLA (no second Pallas pass / extra HBM round trip of y).
    # TODO(synk): eval-mode running_mean/running_var is not modeled here.
    gamma, beta = params['bn']
    cnt = float(N * VT)
    tot = jnp.sum(mom, axis=0)                     # (C, 2)
    mean = tot[:, 0] / cnt
    var = jnp.maximum(tot[:, 1] / cnt - mean * mean, 0.0)
    scale = gamma * jax.lax.rsqrt(var + eps)
    shift = beta - mean * scale
    out = y * scale[:, None] + shift[:, None]      # (C, N*VT)
    return out.reshape(C, N, V, T).transpose(1, 0, 2, 3)


# ----------------------------------------------------------------------------
# Deterministic parameter init (shapes from the PyTorch module __init__)
# ----------------------------------------------------------------------------
def init_params(key, C, kernel_list):
    Cs = C // len(kernel_list)
    params = {'tcn': []}
    for k in kernel_list:
        key, k1, k2, k3, k4 = jax.random.split(key, 5)
        scale = 1.0 / np.sqrt(C * k)
        wf = jax.random.normal(k1, (Cs, C, k), jnp.float32) * scale
        bf = jax.random.normal(k2, (Cs,), jnp.float32) * 0.1
        wg = jax.random.normal(k3, (Cs, C, k), jnp.float32) * scale
        bg = jax.random.normal(k4, (Cs,), jnp.float32) * 0.1
        params['tcn'].append((wf, bf, wg, bg))
    key, k1, k2 = jax.random.split(key, 3)
    wm = jax.random.normal(k1, (C, 3 * C), jnp.float32) / np.sqrt(3 * C)
    bm = jax.random.normal(k2, (C,), jnp.float32) * 0.1
    params['mlp'] = (wm, bm)
    params['bn'] = (jnp.ones((C,), jnp.float32), jnp.zeros((C,), jnp.float32))
    return params


# ----------------------------------------------------------------------------
# Pure-JAX f32 reference (mirrors the PyTorch forward, dropout=identity)
# ----------------------------------------------------------------------------
def reference(x, adj, params, kernel_list, eps=1e-5):
    N, C, V, T = x.shape
    branches = []
    for (wf, bf, wg, bg), k in zip(params['tcn'], kernel_list):
        lp = (k - 1) // 2
        rp = (k - 1) - lp
        xp = jnp.pad(x, ((0, 0), (0, 0), (0, 0), (lp, rp)))
        f = jnp.zeros((N, wf.shape[0], V, T), jnp.float32)
        g = jnp.zeros_like(f)
        for j in range(k):
            xsj = xp[..., j:j + T]
            f = f + jnp.einsum('oc,ncvt->novt', wf[:, :, j], xsj)
            g = g + jnp.einsum('oc,ncvt->novt', wg[:, :, j], xsj)
        f = f + bf[None, :, None, None]
        g = g + bg[None, :, None, None]
        branches.append(jnp.tanh(f) * jax.nn.sigmoid(g))
    h0 = jnp.concatenate(branches, axis=1)
    h1 = jnp.einsum('ncvt,nvw->ncwt', h0, adj)
    h2 = jnp.einsum('ncvt,nvw->ncwt', h1, adj)
    hcat = jnp.concatenate([h0, h1, h2], axis=1)
    wm, bm = params['mlp']
    y = jnp.einsum('oc,ncvt->novt', wm, hcat) + bm[None, :, None, None]
    y = y + x
    gamma, beta = params['bn']
    mean = jnp.mean(y, axis=(0, 2, 3), keepdims=True)
    var = jnp.mean((y - mean) ** 2, axis=(0, 2, 3), keepdims=True)
    return (gamma[None, :, None, None] * (y - mean) / jnp.sqrt(var + eps)
            + beta[None, :, None, None])


if __name__ == "__main__":
    N, C, V, T = 2, 32, 16, 8          # batch, hidden_channels, nodes, time
    kernel_list = [2, 3, 6, 7]
    dropout = 0.3                      # dropout treated as identity (eval)

    key = jax.random.PRNGKey(0)
    kx, ka, kp = jax.random.split(key, 3)
    x = jax.random.normal(kx, (N, C, V, T), jnp.float32)
    adj_raw = jax.random.uniform(ka, (N, V, V), jnp.float32)
    adj = adj_raw / jnp.sum(adj_raw, axis=-1, keepdims=True)
    params = init_params(kp, C, kernel_list)

    out = en_stblock_forward(x, adj, params, kernel_list)
    out = jax.block_until_ready(out)

    ref = reference(x, adj, params, kernel_list)
    # tolerance accounts for bf16 MXU operands (f32 accumulation) vs f32 ref
    np.testing.assert_allclose(np.asarray(out), np.asarray(ref),
                               rtol=2e-2, atol=2e-2)
    print("KERNEL_OK")
</pallas_src>

<mosaic_0001>
module attributes {stable_mosaic.version = 11 : i64} {
  func.func @_st_main_kernel(%arg0: i32, %arg1: memref<32x256xf32, #tpu.memory_space<vmem>>, %arg2: memref<7x1x256xf32, #tpu.memory_space<vmem>>, %arg3: memref<2x128x128xbf16, #tpu.memory_space<vmem>>, %arg4: memref<64x224xbf16, #tpu.memory_space<vmem>>, %arg5: memref<64x1xf32, #tpu.memory_space<vmem>>, %arg6: memref<32x96xbf16, #tpu.memory_space<vmem>>, %arg7: memref<32x1xf32, #tpu.memory_space<vmem>>, %arg8: memref<32x256xf32, #tpu.memory_space<vmem>>, %arg9: memref<1x32x2xf32, #tpu.memory_space<vmem>>) attributes {dimension_semantics = [#tpu.dimension_semantics<parallel>], iteration_bounds = array<i64: 1>, scalar_prefetch = 0 : i64, scratch_operands = 0 : i64, tpu.core_type = #tpu.core_type<tc>, window_params = [{transform_indices = @transform_0, window_bounds = array<i64: 32, 256>}, {pipeline_mode = #tpu.pipeline_mode<synchronous>, transform_indices = @transform_1, window_bounds = array<i64: 7, 1, 256>}, {transform_indices = @transform_2, window_bounds = array<i64: 2, 128, 128>}, {pipeline_mode = #tpu.pipeline_mode<synchronous>, transform_indices = @transform_3, window_bounds = array<i64: 64, 224>}, {pipeline_mode = #tpu.pipeline_mode<synchronous>, transform_indices = @transform_4, window_bounds = array<i64: 64, 1>}, {pipeline_mode = #tpu.pipeline_mode<synchronous>, transform_indices = @transform_5, window_bounds = array<i64: 32, 96>}, {pipeline_mode = #tpu.pipeline_mode<synchronous>, transform_indices = @transform_6, window_bounds = array<i64: 32, 1>}, {transform_indices = @transform_7, window_bounds = array<i64: 32, 256>}, {transform_indices = @transform_8, window_bounds = array<i64: 1, 32, 2>}]} {
    %c0 = arith.constant 0 : index
    %c0_0 = arith.constant 0 : index
    %0 = vector.load %arg1[%c0, %c0_0] : memref<32x256xf32, #tpu.memory_space<vmem>>, vector<32x256xf32>
    %1 = vector.extract_strided_slice %0 {offsets = [0, 253], sizes = [32, 3], strides = [1, 1]} : vector<32x256xf32> to vector<32x3xf32>
    %2 = vector.extract_strided_slice %0 {offsets = [0, 0], sizes = [32, 253], strides = [1, 1]} : vector<32x256xf32> to vector<32x253xf32>
    %3 = tpu.concatenate %1, %2 in 1 : vector<32x3xf32>, vector<32x253xf32> -> vector<32x256xf32>
    %c0_1 = arith.constant 0 : index
    %c0_2 = arith.constant 0 : index
    %c0_3 = arith.constant 0 : index
    %4 = vector.load %arg2[%c0_1, %c0_2, %c0_3] : memref<7x1x256xf32, #tpu.memory_space<vmem>>, vector<1x1x256xf32>
    %5 = vector.shape_cast %4 : vector<1x1x256xf32> to vector<1x256xf32>
    %6 = vector.broadcast %5 : vector<1x256xf32> to vector<32x256xf32>
    %7 = arith.mulf %3, %6 : vector<32x256xf32>
    %8 = arith.truncf %7 : vector<32x256xf32> to vector<32x256xbf16>
    %9 = vector.extract_strided_slice %0 {offsets = [0, 254], sizes = [32, 2], strides = [1, 1]} : vector<32x256xf32> to vector<32x2xf32>
    %10 = vector.extract_strided_slice %0 {offsets = [0, 0], sizes = [32, 254], strides = [1, 1]} : vector<32x256xf32> to vector<32x254xf32>
    %11 = tpu.concatenate %9, %10 in 1 : vector<32x2xf32>, vector<32x254xf32> -> vector<32x256xf32>
    %c1 = arith.constant 1 : index
    %c0_4 = arith.constant 0 : index
    %c0_5 = arith.constant 0 : index
    %12 = vector.load %arg2[%c1, %c0_4, %c0_5] : memref<7x1x256xf32, #tpu.memory_space<vmem>>, vector<1x1x256xf32>
    %13 = vector.shape_cast %12 : vector<1x1x256xf32> to vector<1x256xf32>
    %14 = vector.broadcast %13 : vector<1x256xf32> to vector<32x256xf32>
    %15 = arith.mulf %11, %14 : vector<32x256xf32>
    %16 = arith.truncf %15 : vector<32x256xf32> to vector<32x256xbf16>
    %17 = vector.extract_strided_slice %0 {offsets = [0, 255], sizes = [32, 1], strides = [1, 1]} : vector<32x256xf32> to vector<32x1xf32>
    %18 = vector.extract_strided_slice %0 {offsets = [0, 0], sizes = [32, 255], strides = [1, 1]} : vector<32x256xf32> to vector<32x255xf32>
    %19 = tpu.concatenate %17, %18 in 1 : vector<32x1xf32>, vector<32x255xf32> -> vector<32x256xf32>
    %c2 = arith.constant 2 : index
    %c0_6 = arith.constant 0 : index
    %c0_7 = arith.constant 0 : index
    %20 = vector.load %arg2[%c2, %c0_6, %c0_7] : memref<7x1x256xf32, #tpu.memory_space<vmem>>, vector<1x1x256xf32>
    %21 = vector.shape_cast %20 : vector<1x1x256xf32> to vector<1x256xf32>
    %22 = vector.broadcast %21 : vector<1x256xf32> to vector<32x256xf32>
    %23 = arith.mulf %19, %22 : vector<32x256xf32>
    %24 = arith.truncf %23 : vector<32x256xf32> to vector<32x256xbf16>
    %25 = arith.truncf %0 : vector<32x256xf32> to vector<32x256xbf16>
    %26 = vector.extract_strided_slice %0 {offsets = [0, 1], sizes = [32, 255], strides = [1, 1]} : vector<32x256xf32> to vector<32x255xf32>
    %27 = vector.extract_strided_slice %0 {offsets = [0, 0], sizes = [32, 1], strides = [1, 1]} : vector<32x256xf32> to vector<32x1xf32>
    %28 = tpu.concatenate %26, %27 in 1 : vector<32x255xf32>, vector<32x1xf32> -> vector<32x256xf32>
    %c4 = arith.constant 4 : index
    %c0_8 = arith.constant 0 : index
    %c0_9 = arith.constant 0 : index
    %29 = vector.load %arg2[%c4, %c0_8, %c0_9] : memref<7x1x256xf32, #tpu.memory_space<vmem>>, vector<1x1x256xf32>
    %30 = vector.shape_cast %29 : vector<1x1x256xf32> to vector<1x256xf32>
    %31 = vector.broadcast %30 : vector<1x256xf32> to vector<32x256xf32>
    %32 = arith.mulf %28, %31 : vector<32x256xf32>
    %33 = arith.truncf %32 : vector<32x256xf32> to vector<32x256xbf16>
    %34 = vector.extract_strided_slice %0 {offsets = [0, 2], sizes = [32, 254], strides = [1, 1]} : vector<32x256xf32> to vector<32x254xf32>
    %35 = vector.extract_strided_slice %0 {offsets = [0, 0], sizes = [32, 2], strides = [1, 1]} : vector<32x256xf32> to vector<32x2xf32>
    %36 = tpu.concatenate %34, %35 in 1 : vector<32x254xf32>, vector<32x2xf32> -> vector<32x256xf32>
    %c5 = arith.constant 5 : index
    %c0_10 = arith.constant 0 : index
    %c0_11 = arith.constant 0 : index
    %37 = vector.load %arg2[%c5, %c0_10, %c0_11] : memref<7x1x256xf32, #tpu.memory_space<vmem>>, vector<1x1x256xf32>
    %38 = vector.shape_cast %37 : vector<1x1x256xf32> to vector<1x256xf32>
    %39 = vector.broadcast %38 : vector<1x256xf32> to vector<32x256xf32>
    %40 = arith.mulf %36, %39 : vector<32x256xf32>
    %41 = arith.truncf %40 : vector<32x256xf32> to vector<32x256xbf16>
    %42 = vector.extract_strided_slice %0 {offsets = [0, 3], sizes = [32, 253], strides = [1, 1]} : vector<32x256xf32> to vector<32x253xf32>
    %43 = vector.extract_strided_slice %0 {offsets = [0, 0], sizes = [32, 3], strides = [1, 1]} : vector<32x256xf32> to vector<32x3xf32>
    %44 = tpu.concatenate %42, %43 in 1 : vector<32x253xf32>, vector<32x3xf32> -> vector<32x256xf32>
    %c6 = arith.constant 6 : index
    %c0_12 = arith.constant 0 : index
    %c0_13 = arith.constant 0 : index
    %45 = vector.load %arg2[%c6, %c0_12, %c0_13] : memref<7x1x256xf32, #tpu.memory_space<vmem>>, vector<1x1x256xf32>
    %46 = vector.shape_cast %45 : vector<1x1x256xf32> to vector<1x256xf32>
    %47 = vector.broadcast %46 : vector<1x256xf32> to vector<32x256xf32>
    %48 = arith.mulf %44, %47 : vector<32x256xf32>
    %49 = arith.truncf %48 : vector<32x256xf32> to vector<32x256xbf16>
    %50 = tpu.concatenate %8, %16, %24, %25, %33, %41, %49 in 0 : vector<32x256xbf16>, vector<32x256xbf16>, vector<32x256xbf16>, vector<32x256xbf16>, vector<32x256xbf16>, vector<32x256xbf16>, vector<32x256xbf16> -> vector<224x256xbf16>
    %c0_14 = arith.constant 0 : index
    %c0_15 = arith.constant 0 : index
    %51 = vector.load %arg4[%c0_14, %c0_15] : memref<64x224xbf16, #tpu.memory_space<vmem>>, vector<64x224xbf16>
    %cst = arith.constant dense<0.000000e+00> : vector<64x256xf32>
    %52 = tpu.matmul %51, %50, %cst {dimension_numbers = #tpu.dot_dimension_numbers<[1], [0], [0], [1], [0, 0, 1, 1], [], []>} : vector<64x224xbf16>, vector<224x256xbf16>, vector<64x256xf32> -> vector<64x256xf32>
    %c0_16 = arith.constant 0 : index
    %c0_17 = arith.constant 0 : index
    %53 = vector.load %arg5[%c0_16, %c0_17] : memref<64x1xf32, #tpu.memory_space<vmem>>, vector<64x1xf32>
    %54 = vector.broadcast %53 : vector<64x1xf32> to vector<64x256xf32>
    %55 = arith.addf %52, %54 : vector<64x256xf32>
    %56 = vector.extract_strided_slice %55 {offsets = [0, 0], sizes = [32, 256], strides = [1, 1]} : vector<64x256xf32> to vector<32x256xf32>
    %57 = math.tanh %56 : vector<32x256xf32>
    %58 = vector.extract_strided_slice %55 {offsets = [32, 0], sizes = [32, 256], strides = [1, 1]} : vector<64x256xf32> to vector<32x256xf32>
    %59 = arith.negf %58 : vector<32x256xf32>
    %60 = math.exp %59 : vector<32x256xf32>
    %cst_18 = arith.constant 1.000000e+00 : f32
    %61 = vector.broadcast %cst_18 : f32 to vector<32x256xf32>
    %62 = arith.addf %61, %60 : vector<32x256xf32>
    %63 = arith.divf %61, %62 : vector<32x256xf32>
    %64 = arith.mulf %57, %63 : vector<32x256xf32>
    %65 = arith.truncf %64 : vector<32x256xf32> to vector<32x256xbf16>
    %c0_19 = arith.constant 0 : index
    %c0_20 = arith.constant 0 : index
    %c0_21 = arith.constant 0 : index
    %66 = vector.load %arg3[%c0_19, %c0_20, %c0_21] : memref<2x128x128xbf16, #tpu.memory_space<vmem>>, vector<1x128x128xbf16>
    %67 = vector.shape_cast %66 : vector<1x128x128xbf16> to vector<128x128xbf16>
    %68 = vector.extract_strided_slice %65 {offsets = [0, 0], sizes = [32, 128], strides = [1, 1]} : vector<32x256xbf16> to vector<32x128xbf16>
    %cst_22 = arith.constant dense<0.000000e+00> : vector<32x128xf32>
    %69 = tpu.matmul %68, %67, %cst_22 {dimension_numbers = #tpu.dot_dimension_numbers<[1], [0], [0], [1], [0, 0, 1, 1], [], []>} : vector<32x128xbf16>, vector<128x128xbf16>, vector<32x128xf32> -> vector<32x128xf32>
    %70 = arith.truncf %69 : vector<32x128xf32> to vector<32x128xbf16>
    %cst_23 = arith.constant dense<0.000000e+00> : vector<32x128xf32>
    %71 = tpu.matmul %70, %67, %cst_23 {dimension_numbers = #tpu.dot_dimension_numbers<[1], [0], [0], [1], [0, 0, 1, 1], [], []>} : vector<32x128xbf16>, vector<128x128xbf16>, vector<32x128xf32> -> vector<32x128xf32>
    %72 = arith.truncf %71 : vector<32x128xf32> to vector<32x128xbf16>
    %c1_24 = arith.constant 1 : index
    %c0_25 = arith.constant 0 : index
    %c0_26 = arith.constant 0 : index
    %73 = vector.load %arg3[%c1_24, %c0_25, %c0_26] : memref<2x128x128xbf16, #tpu.memory_space<vmem>>, vector<1x128x128xbf16>
    %74 = vector.shape_cast %73 : vector<1x128x128xbf16> to vector<128x128xbf16>
    %75 = vector.extract_strided_slice %65 {offsets = [0, 128], sizes = [32, 128], strides = [1, 1]} : vector<32x256xbf16> to vector<32x128xbf16>
    %cst_27 = arith.constant dense<0.000000e+00> : vector<32x128xf32>
    %76 = tpu.matmul %75, %74, %cst_27 {dimension_numbers = #tpu.dot_dimension_numbers<[1], [0], [0], [1], [0, 0, 1, 1], [], []>} : vector<32x128xbf16>, vector<128x128xbf16>, vector<32x128xf32> -> vector<32x128xf32>
    %77 = arith.truncf %76 : vector<32x128xf32> to vector<32x128xbf16>
    %cst_28 = arith.constant dense<0.000000e+00> : vector<32x128xf32>
    %78 = tpu.matmul %77, %74, %cst_28 {dimension_numbers = #tpu.dot_dimension_numbers<[1], [0], [0], [1], [0, 0, 1, 1], [], []>} : vector<32x128xbf16>, vector<128x128xbf16>, vector<32x128xf32> -> vector<32x128xf32>
    %79 = arith.truncf %78 : vector<32x128xf32> to vector<32x128xbf16>
    %80 = tpu.concatenate %70, %77 in 1 : vector<32x128xbf16>, vector<32x128xbf16> -> vector<32x256xbf16>
    %81 = tpu.concatenate %72, %79 in 1 : vector<32x128xbf16>, vector<32x128xbf16> -> vector<32x256xbf16>
    %82 = tpu.concatenate %65, %80, %81 in 0 : vector<32x256xbf16>, vector<32x256xbf16>, vector<32x256xbf16> -> vector<96x256xbf16>
    %c0_29 = arith.constant 0 : index
    %c0_30 = arith.constant 0 : index
    %83 = vector.load %arg6[%c0_29, %c0_30] : memref<32x96xbf16, #tpu.memory_space<vmem>>, vector<32x96xbf16>
    %cst_31 = arith.constant dense<0.000000e+00> : vector<32x256xf32>
    %84 = tpu.matmul %83, %82, %cst_31 {dimension_numbers = #tpu.dot_dimension_numbers<[1], [0], [0], [1], [0, 0, 1, 1], [], []>} : vector<32x96xbf16>, vector<96x256xbf16>, vector<32x256xf32> -> vector<32x256xf32>
    %c0_32 = arith.constant 0 : index
    %c0_33 = arith.constant 0 : index
    %85 = vector.load %arg7[%c0_32, %c0_33] : memref<32x1xf32, #tpu.memory_space<vmem>>, vector<32x1xf32>
    %86 = vector.broadcast %85 : vector<32x1xf32> to vector<32x256xf32>
    %87 = arith.addf %84, %86 : vector<32x256xf32>
    %88 = arith.addf %87, %0 : vector<32x256xf32>
    %c0_34 = arith.constant 0 : index
    %c0_35 = arith.constant 0 : index
    %89 = vector.load %arg8[%c0_34, %c0_35] : memref<32x256xf32, #tpu.memory_space<vmem>>, vector<32x256xf32>
    tpu.vector_store %arg8[%c0_34, %c0_35], %88 {strides = array<i32>} : memref<32x256xf32, #tpu.memory_space<vmem>>, vector<32x256xf32>,
    %cst_36 = arith.constant dense<0.000000e+00> : vector<32xf32>
    %90 = vector.multi_reduction <add>, %88, %cst_36 [1] : vector<32x256xf32> to vector<32xf32>
    %91 = vector.shape_cast %90 : vector<32xf32> to vector<32x1xf32>
    %92 = arith.mulf %88, %88 : vector<32x256xf32>
    %cst_37 = arith.constant dense<0.000000e+00> : vector<32xf32>
    %93 = vector.multi_reduction <add>, %92, %cst_37 [1] : vector<32x256xf32> to vector<32xf32>
    %94 = vector.shape_cast %93 : vector<32xf32> to vector<32x1xf32>
    %95 = tpu.concatenate %91, %94 in 1 : vector<32x1xf32>, vector<32x1xf32> -> vector<32x2xf32>
    %c0_38 = arith.constant 0 : index
    %c0_39 = arith.constant 0 : index
    %c0_40 = arith.constant 0 : index
    %96 = vector.load %arg9[%c0_38, %c0_39, %c0_40] : memref<1x32x2xf32, #tpu.memory_space<vmem>>, vector<1x32x2xf32>
    %97 = vector.shape_cast %96 : vector<1x32x2xf32> to vector<32x2xf32>
    %98 = vector.shape_cast %95 : vector<32x2xf32> to vector<1x32x2xf32>
    tpu.vector_store %arg9[%c0_38, %c0_39, %c0_40], %98 {strides = array<i32>} : memref<1x32x2xf32, #tpu.memory_space<vmem>>, vector<1x32x2xf32>,
    return
  }
  func.func @transform_0(%arg0: i32) -> (i32, i32) {
    %c0_i32 = arith.constant 0 : i32
    %c0_i32_0 = arith.constant 0 : i32
    return %c0_i32, %arg0 : i32, i32
  }
  func.func @transform_1(%arg0: i32) -> (i32, i32, i32) {
    %c0_i32 = arith.constant 0 : i32
    %c0_i32_0 = arith.constant 0 : i32
    %c0_i32_1 = arith.constant 0 : i32
    %c0_i32_2 = arith.constant 0 : i32
    return %c0_i32, %c0_i32_0, %c0_i32_1 : i32, i32, i32
  }
  func.func @transform_2(%arg0: i32) -> (i32, i32, i32) {
    %c0_i32 = arith.constant 0 : i32
    %c0_i32_0 = arith.constant 0 : i32
    %c0_i32_1 = arith.constant 0 : i32
    return %arg0, %c0_i32, %c0_i32_0 : i32, i32, i32
  }
  func.func @transform_3(%arg0: i32) -> (i32, i32) {
    %c0_i32 = arith.constant 0 : i32
    %c0_i32_0 = arith.constant 0 : i32
    %c0_i32_1 = arith.constant 0 : i32
    return %c0_i32, %c0_i32_0 : i32, i32
  }
  func.func @transform_4(%arg0: i32) -> (i32, i32) {
    %c0_i32 = arith.constant 0 : i32
    %c0_i32_0 = arith.constant 0 : i32
    %c0_i32_1 = arith.constant 0 : i32
    return %c0_i32, %c0_i32_0 : i32, i32
  }
  func.func @transform_5(%arg0: i32) -> (i32, i32) {
    %c0_i32 = arith.constant 0 : i32
    %c0_i32_0 = arith.constant 0 : i32
    %c0_i32_1 = arith.constant 0 : i32
    return %c0_i32, %c0_i32_0 : i32, i32
  }
  func.func @transform_6(%arg0: i32) -> (i32, i32) {
    %c0_i32 = arith.constant 0 : i32
    %c0_i32_0 = arith.constant 0 : i32
    %c0_i32_1 = arith.constant 0 : i32
    return %c0_i32, %c0_i32_0 : i32, i32
  }
  func.func @transform_7(%arg0: i32) -> (i32, i32) {
    %c0_i32 = arith.constant 0 : i32
    %c0_i32_0 = arith.constant 0 : i32
    return %c0_i32, %arg0 : i32, i32
  }
  func.func @transform_8(%arg0: i32) -> (i32, i32, i32) {
    %c0_i32 = arith.constant 0 : i32
    %c0_i32_0 = arith.constant 0 : i32
    %c0_i32_1 = arith.constant 0 : i32
    return %arg0, %c0_i32, %c0_i32_0 : i32, i32, i32
  }
}

</mosaic_0001>

<llo_original>
// kernel: tpu_custom_call.1
$region0: #{tpu_custom_call.1}
  #allocation0 [shape = 'u32[]', space=smem, size = 0x4, offset = 0x4, fixed_abs, tag = 'smem constant byte address 0x4 - core index']
  #allocation1 [shape = 'u32[144,128]{1,0:T(1,128)}', space=vmem, size = 0x12000, scoped, tag = 'internal scratch']
  %s0 = inlined_call_operand.vmem [shape: f32[32,256], index: 0, kind: input, shape index: {}]
  %s1 = inlined_call_operand.vmem [shape: f32[7,1,256], index: 1, kind: input, shape index: {}]
  %s2 = inlined_call_operand.hbm [shape: bf16[2,128,128], index: 2, kind: input, shape index: {}]
  %s3 = inlined_call_operand.hbm [shape: bf16[64,224], index: 3, kind: input, shape index: {}]
  %s4 = inlined_call_operand.vmem [shape: f32[64,1], index: 4, kind: input, shape index: {}]
  %s5 = inlined_call_operand.vmem [shape: bf16[32,96], index: 5, kind: input, shape index: {}]
  %s6 = inlined_call_operand.vmem [shape: f32[32,1], index: 6, kind: input, shape index: {}]
  %s7 = inlined_call_operand.hbm [shape: f32[32,256], index: 7, kind: output, shape index: {0}]
  %s8 = inlined_call_operand.vmem [shape: f32[1,32,2], index: 8, kind: output, shape index: {1}]
  %9 = xla_tuple %s7, %s8
  %s10 = sld [smem:[#allocation0]]
  $region54: #{tpu_custom_call.1} parent=0
    _
  %s12 = ssub.s32 1, %s10
  %s13 = scalar_select 0, %s12, %s10
  $region1: #{tpu_custom_call.1} parent=0
    #allocation2 [shape = 'u8[65536]{0}', space=vmem, size = 0x10000, scoped, tag = 'input window, operand 2, single buffered']
    #allocation3 [shape = 's32[1]{0}', space=sflag, size = 0x4, scoped, tag = 'scoped memory for tpu_custom_call.1']
    #allocation4 [shape = 's32[1]{0}', space=sflag, size = 0x4, scoped, tag = 'scoped memory for tpu_custom_call.1']
    #allocation5 [shape = 'u8[32768]{0}', space=vmem, size = 0x8000, scoped, tag = 'input window, operand 3, single buffered']
    #allocation6 [shape = 's32[1]{0}', space=sflag, size = 0x4, scoped, tag = 'scoped memory for tpu_custom_call.1']
    #allocation7 [shape = 'u8[32768]{0}', space=vmem, size = 0x8000, scoped, tag = 'output window, operand 0, single buffered']
    %14 = vsyncpa [#allocation3], 0
    %15 = vsyncpa [#allocation6], 0
    %16 = vsyncpa [#allocation4], 0
    // Predicated region
    $region2: #{tpu_custom_call.1} parent=1 // pred_check
      _
    $region3: #{tpu_custom_call.1} parent=1 // pred_check_branch
      %18 = sbr.rel (0) target = $region5
    $region4: #{tpu_custom_call.1} parent=1 // pred_region
      _
    $region5: #{tpu_custom_call.1} parent=1 // pred_fallthru
      _
    // Predicated region
    $region6: #{tpu_custom_call.1} parent=1 // pred_check
      _
    $region7: #{tpu_custom_call.1} parent=1 // pred_check_branch
      %20 = sbr.rel (0) target = $region9
    $region8: #{tpu_custom_call.1} parent=1 // pred_region
      _
    $region9: #{tpu_custom_call.1} parent=1 // pred_fallthru
      _
    // Predicated region
    $region10: #{tpu_custom_call.1} parent=1 // pred_check
      _
    $region11: #{tpu_custom_call.1} parent=1 // pred_check_branch
      %22 = sbr.rel (0) target = $region13
    $region12: #{tpu_custom_call.1} parent=1 // pred_region
      %s24 = ssub.s32 2048, 2048
      %25 = vsyncadd [#allocation3], %s24
      %s26 = sshll.u32 [#allocation2], 4
      %s27 = int_to_ptr.vmem [resolvable:$true] %s26
      %32 = dma.hbm_to_vmem [thread:$0]  %s2, 2048, %s27, [#allocation3], 64, 64, 4
    $region13: #{tpu_custom_call.1} parent=1 // pred_fallthru
      _
    // Predicated region
    $region14: #{tpu_custom_call.1} parent=1 // pred_check
      _
    $region15: #{tpu_custom_call.1} parent=1 // pred_check_branch
      %34 = sbr.rel (0) target = $region17
    $region16: #{tpu_custom_call.1} parent=1 // pred_region
      %s36 = ssub.s32 1024, 1024
      %37 = vsyncadd [#allocation6], %s36
      %s38 = sshll.u32 [#allocation5], 4
      %s39 = int_to_ptr.vmem [resolvable:$true] %s38
      %44 = dma.hbm_to_vmem [thread:$0]  %s3, 1024, %s39, [#allocation6], 128, 128, 8
    $region17: #{tpu_custom_call.1} parent=1 // pred_fallthru
      _
    // Predicated region
    $region18: #{tpu_custom_call.1} parent=1 // pred_check
      _
    $region19: #{tpu_custom_call.1} parent=1 // pred_check_branch
      %46 = sbr.rel (0) target = $region21
    $region20: #{tpu_custom_call.1} parent=1 // pred_region
      _
    $region21: #{tpu_custom_call.1} parent=1 // pred_fallthru
      _
    // Predicated region
    $region22: #{tpu_custom_call.1} parent=1 // pred_check
      _
    $region23: #{tpu_custom_call.1} parent=1 // pred_check_branch
      %48 = sbr.rel (0) target = $region25
    $region24: #{tpu_custom_call.1} parent=1 // pred_region
      _
    $region25: #{tpu_custom_call.1} parent=1 // pred_fallthru
      _
    // Predicated region
    $region26: #{tpu_custom_call.1} parent=1 // pred_check
      _
    $region27: #{tpu_custom_call.1} parent=1 // pred_check_branch
      %50 = sbr.rel (0) target = $region29
    $region28: #{tpu_custom_call.1} parent=1 // pred_region
      _
    $region29: #{tpu_custom_call.1} parent=1 // pred_fallthru
      _
    // Predicated region
    $region30: #{tpu_custom_call.1} parent=1 // pred_check
      _
    $region31: #{tpu_custom_call.1} parent=1 // pred_check_branch
      %52 = sbr.rel (0) target = $region33
    $region32: #{tpu_custom_call.1} parent=1 // pred_region
      %53 = dma.done [#allocation3], 2048
    $region33: #{tpu_custom_call.1} parent=1 // pred_fallthru
      _
    // Predicated region
    $region34: #{tpu_custom_call.1} parent=1 // pred_check
      _
    $region35: #{tpu_custom_call.1} parent=1 // pred_check_branch
      %55 = sbr.rel (0) target = $region37
    $region36: #{tpu_custom_call.1} parent=1 // pred_region
      %56 = dma.done [#allocation6], 1024
    $region37: #{tpu_custom_call.1} parent=1 // pred_fallthru
      _
    %v58 = vld [vmem:[%s0] sm:$0xff]
    %v59 = vld [vmem:[%s0 + $0x8] sm:$0xff]
    %v60 = vld [vmem:[%s0 + $0x10] sm:$0xff]
    %v61 = vld [vmem:[%s0 + $0x18] sm:$0xff]
    %v62 = vld [vmem:[%s0 + $0x20] sm:$0xff]
    %v63 = vld [vmem:[%s0 + $0x28] sm:$0xff]
    %v64 = vld [vmem:[%s0 + $0x30] sm:$0xff]
    %v65 = vld [vmem:[%s0 + $0x38] sm:$0xff]
    %70 = vrot.lane.b32.xlu0 %v59, 3
    %v71 = vpop.permute.xlu0 %70
    %72 = vrot.lane.b32.xlu0 %v61, 3
    %v73 = vpop.permute.xlu0 %72
    %74 = vrot.lane.b32.xlu0 %v63, 3
    %v75 = vpop.permute.xlu0 %74
    %76 = vrot.lane.b32.xlu0 %v65, 3
    %v77 = vpop.permute.xlu0 %76
    %86 = vrot.lane.b32.xlu0 %v58, 3
    %v87 = vpop.permute.xlu0 %86
    %88 = vrot.lane.b32.xlu0 %v60, 3
    %v89 = vpop.permute.xlu0 %88
    %90 = vrot.lane.b32.xlu0 %v62, 3
    %v91 = vpop.permute.xlu0 %90
    %92 = vrot.lane.b32.xlu0 %v64, 3
    %v93 = vpop.permute.xlu0 %92
    %vm94 = vcmask 23552
    %v95 = vsel %vm94, %v87, %v71
    %v96 = vsel %vm94, %v89, %v73
    %v97 = vsel %vm94, %v91, %v75
    %v98 = vsel %vm94, %v93, %v77
    %v107 = vsel %vm94, %v71, %v87
    %v108 = vsel %vm94, %v73, %v89
    %v109 = vsel %vm94, %v75, %v91
    %v110 = vsel %vm94, %v77, %v93
    %v111 = vld [vmem:[%s1] sm:$0x3]
    %v113 = vlaneseq
    %v114 = vshrl.u32 %v113, 7
    %v115 = vsub.s32 0, %v114
    %v116 = vrot.slane %v111, %v115
    %v117 = vlaneseq
    %v118 = vshrl.u32 %v117, 7
    %v119 = vsub.s32 1, %v118
    %v120 = vrot.slane %v111, %v119
    %v123 = vmul.f32 %v107, %v116
    %v124 = vmul.f32 %v95, %v120
    %v125 = vmul.f32 %v108, %v116
    %v126 = vmul.f32 %v96, %v120
    %v127 = vmul.f32 %v109, %v116
    %v128 = vmul.f32 %v97, %v120
    %v129 = vmul.f32 %v110, %v116
    %v130 = vmul.f32 %v98, %v120
    %v131 = vpack.c.bf16 %v125, %v123
    %v132 = vpack.c.bf16 %v126, %v124
    %v133 = vpack.c.bf16 %v129, %v127
    %v134 = vpack.c.bf16 %v130, %v128
    %135 = vrot.lane.b32.xlu0 %v59, 2
    %v136 = vpop.permute.xlu0 %135
    %137 = vrot.lane.b32.xlu0 %v61, 2
    %v138 = vpop.permute.xlu0 %137
    %139 = vrot.lane.b32.xlu0 %v63, 2
    %v140 = vpop.permute.xlu0 %139
    %141 = vrot.lane.b32.xlu0 %v65, 2
    %v142 = vpop.permute.xlu0 %141
    %147 = vrot.lane.b32.xlu0 %v58, 2
    %v148 = vpop.permute.xlu0 %147
    %149 = vrot.lane.b32.xlu0 %v60, 2
    %v150 = vpop.permute.xlu0 %149
    %151 = vrot.lane.b32.xlu0 %v62, 2
    %v152 = vpop.permute.xlu0 %151
    %153 = vrot.lane.b32.xlu0 %v64, 2
    %v154 = vpop.permute.xlu0 %153
    %vm155 = vcmask 15360
    %v156 = vsel %vm155, %v148, %v136
    %v157 = vsel %vm155, %v150, %v138
    %v158 = vsel %vm155, %v152, %v140
    %v159 = vsel %vm155, %v154, %v142
    %v168 = vsel %vm155, %v136, %v148
    %v169 = vsel %vm155, %v138, %v150
    %v170 = vsel %vm155, %v140, %v152
    %v171 = vsel %vm155, %v142, %v154
    %s172 = scalar_lea.vmem %s1, 2
    %v173 = vld [vmem:[%s172] sm:$0x3]
    %v175 = vlaneseq
    %v176 = vshrl.u32 %v175, 7
    %v177 = vsub.s32 0, %v176
    %v178 = vrot.slane %v173, %v177
    %v179 = vlaneseq
    %v180 = vshrl.u32 %v179, 7
    %v181 = vsub.s32 1, %v180
    %v182 = vrot.slane %v173, %v181
    %v185 = vmul.f32 %v168, %v178
    %v186 = vmul.f32 %v156, %v182
    %v187 = vmul.f32 %v169, %v178
    %v188 = vmul.f32 %v157, %v182
    %v189 = vmul.f32 %v170, %v178
    %v190 = vmul.f32 %v158, %v182
    %v191 = vmul.f32 %v171, %v178
    %v192 = vmul.f32 %v159, %v182
    %v193 = vpack.c.bf16 %v187, %v185
    %v194 = vpack.c.bf16 %v188, %v186
    %v195 = vpack.c.bf16 %v191, %v189
    %v196 = vpack.c.bf16 %v192, %v190
    %197 = vrot.lane.b32.xlu0 %v59, 1
    %v198 = vpop.permute.xlu0 %197
    %199 = vrot.lane.b32.xlu0 %v61, 1
    %v200 = vpop.permute.xlu0 %199
    %201 = vrot.lane.b32.xlu0 %v63, 1
    %v202 = vpop.permute.xlu0 %201
    %203 = vrot.lane.b32.xlu0 %v65, 1
    %v204 = vpop.permute.xlu0 %203
    %209 = vrot.lane.b32.xlu0 %v58, 1
    %v210 = vpop.permute.xlu0 %209
    %211 = vrot.lane.b32.xlu0 %v60, 1
    %v212 = vpop.permute.xlu0 %211
    %213 = vrot.lane.b32.xlu0 %v62, 1
    %v214 = vpop.permute.xlu0 %213
    %215 = vrot.lane.b32.xlu0 %v64, 1
    %v216 = vpop.permute.xlu0 %215
    %vm217 = vcmask 7168
    %v218 = vsel %vm217, %v210, %v198
    %v219 = vsel %vm217, %v212, %v200
    %v220 = vsel %vm217, %v214, %v202
    %v221 = vsel %vm217, %v216, %v204
    %v230 = vsel %vm217, %v198, %v210
    %v231 = vsel %vm217, %v200, %v212
    %v232 = vsel %vm217, %v202, %v214
    %v233 = vsel %vm217, %v204, %v216
    %s234 = scalar_lea.vmem %s1, 4
    %v235 = vld [vmem:[%s234] sm:$0x3]
    %v237 = vlaneseq
    %v238 = vshrl.u32 %v237, 7
    %v239 = vsub.s32 0, %v238
    %v240 = vrot.slane %v235, %v239
    %v241 = vlaneseq
    %v242 = vshrl.u32 %v241, 7
    %v243 = vsub.s32 1, %v242
    %v244 = vrot.slane %v235, %v243
    %v247 = vmul.f32 %v230, %v240
    %v248 = vmul.f32 %v218, %v244
    %v249 = vmul.f32 %v231, %v240
    %v250 = vmul.f32 %v219, %v244
    %v251 = vmul.f32 %v232, %v240
    %v252 = vmul.f32 %v220, %v244
    %v253 = vmul.f32 %v233, %v240
    %v254 = vmul.f32 %v221, %v244
    %v255 = vpack.c.bf16 %v249, %v247
    %v256 = vpack.c.bf16 %v250, %v248
    %v257 = vpack.c.bf16 %v253, %v251
    %v258 = vpack.c.bf16 %v254, %v252
    %v259 = vpack.c.bf16 %v60, %v58
    %v260 = vpack.c.bf16 %v61, %v59
    %v261 = vpack.c.bf16 %v64, %v62
    %v262 = vpack.c.bf16 %v65, %v63
    %263 = vrot.lane.b32.xlu0 %v58, 127
    %v264 = vpop.permute.xlu0 %263
    %265 = vrot.lane.b32.xlu0 %v59, 127
    %v266 = vpop.permute.xlu0 %265
    %267 = vrot.lane.b32.xlu0 %v60, 127
    %v268 = vpop.permute.xlu0 %267
    %269 = vrot.lane.b32.xlu0 %v61, 127
    %v270 = vpop.permute.xlu0 %269
    %271 = vrot.lane.b32.xlu0 %v62, 127
    %v272 = vpop.permute.xlu0 %271
    %273 = vrot.lane.b32.xlu0 %v63, 127
    %v274 = vpop.permute.xlu0 %273
    %275 = vrot.lane.b32.xlu0 %v64, 127
    %v276 = vpop.permute.xlu0 %275
    %277 = vrot.lane.b32.xlu0 %v65, 127
    %v278 = vpop.permute.xlu0 %277
    %vm279 = vcmask 1039360
    %v280 = vsel %vm279, %v264, %v266
    %v281 = vsel %vm279, %v268, %v270
    %v282 = vsel %vm279, %v272, %v274
    %v283 = vsel %vm279, %v276, %v278
    %v296 = vsel %vm279, %v266, %v264
    %v297 = vsel %vm279, %v270, %v268
    %v298 = vsel %vm279, %v274, %v272
    %v299 = vsel %vm279, %v278, %v276
    %s300 = scalar_lea.vmem %s1, 8
    %v301 = vld [vmem:[%s300] sm:$0x3]
    %v303 = vlaneseq
    %v304 = vshrl.u32 %v303, 7
    %v305 = vsub.s32 0, %v304
    %v306 = vrot.slane %v301, %v305
    %v307 = vlaneseq
    %v308 = vshrl.u32 %v307, 7
    %v309 = vsub.s32 1, %v308
    %v310 = vrot.slane %v301, %v309
    %v313 = vmul.f32 %v280, %v306
    %v314 = vmul.f32 %v296, %v310
    %v315 = vmul.f32 %v281, %v306
    %v316 = vmul.f32 %v297, %v310
    %v317 = vmul.f32 %v282, %v306
    %v318 = vmul.f32 %v298, %v310
    %v319 = vmul.f32 %v283, %v306
    %v320 = vmul.f32 %v299, %v310
    %v321 = vpack.c.bf16 %v315, %v313
    %v322 = vpack.c.bf16 %v316, %v314
    %v323 = vpack.c.bf16 %v319, %v317
    %v324 = vpack.c.bf16 %v320, %v318
    %325 = vrot.lane.b32.xlu0 %v58, 126
    %v326 = vpop.permute.xlu0 %325
    %327 = vrot.lane.b32.xlu0 %v59, 126
    %v328 = vpop.permute.xlu0 %327
    %329 = vrot.lane.b32.xlu0 %v60, 126
    %v330 = vpop.permute.xlu0 %329
    %331 = vrot.lane.b32.xlu0 %v61, 126
    %v332 = vpop.permute.xlu0 %331
    %333 = vrot.lane.b32.xlu0 %v62, 126
    %v334 = vpop.permute.xlu0 %333
    %335 = vrot.lane.b32.xlu0 %v63, 126
    %v336 = vpop.permute.xlu0 %335
    %337 = vrot.lane.b32.xlu0 %v64, 126
    %v338 = vpop.permute.xlu0 %337
    %339 = vrot.lane.b32.xlu0 %v65, 126
    %v340 = vpop.permute.xlu0 %339
    %vm341 = vcmask 1031168
    %v342 = vsel %vm341, %v326, %v328
    %v343 = vsel %vm341, %v330, %v332
    %v344 = vsel %vm341, %v334, %v336
    %v345 = vsel %vm341, %v338, %v340
    %v358 = vsel %vm341, %v328, %v326
    %v359 = vsel %vm341, %v332, %v330
    %v360 = vsel %vm341, %v336, %v334
    %v361 = vsel %vm341, %v340, %v338
    %s362 = scalar_lea.vmem %s1, 10
    %v363 = vld [vmem:[%s362] sm:$0x3]
    %v365 = vlaneseq
    %v366 = vshrl.u32 %v365, 7
    %v367 = vsub.s32 0, %v366
    %v368 = vrot.slane %v363, %v367
    %v369 = vlaneseq
    %v370 = vshrl.u32 %v369, 7
    %v371 = vsub.s32 1, %v370
    %v372 = vrot.slane %v363, %v371
    %v375 = vmul.f32 %v342, %v368
    %v376 = vmul.f32 %v358, %v372
    %v377 = vmul.f32 %v343, %v368
    %v378 = vmul.f32 %v359, %v372
    %v379 = vmul.f32 %v344, %v368
    %v380 = vmul.f32 %v360, %v372
    %v381 = vmul.f32 %v345, %v368
    %v382 = vmul.f32 %v361, %v372
    %v383 = vpack.c.bf16 %v377, %v375
    %v384 = vpack.c.bf16 %v378, %v376
    %v385 = vpack.c.bf16 %v381, %v379
    %v386 = vpack.c.bf16 %v382, %v380
    %387 = vrot.lane.b32.xlu0 %v58, 125
    %v388 = vpop.permute.xlu0 %387
    %389 = vrot.lane.b32.xlu0 %v59, 125
    %v390 = vpop.permute.xlu0 %389
    %391 = vrot.lane.b32.xlu0 %v60, 125
    %v392 = vpop.permute.xlu0 %391
    %393 = vrot.lane.b32.xlu0 %v61, 125
    %v394 = vpop.permute.xlu0 %393
    %395 = vrot.lane.b32.xlu0 %v62, 125
    %v396 = vpop.permute.xlu0 %395
    %397 = vrot.lane.b32.xlu0 %v63, 125
    %v398 = vpop.permute.xlu0 %397
    %399 = vrot.lane.b32.xlu0 %v64, 125
    %v400 = vpop.permute.xlu0 %399
    %401 = vrot.lane.b32.xlu0 %v65, 125
    %v402 = vpop.permute.xlu0 %401
    %vm403 = vcmask 1022976
    %v404 = vsel %vm403, %v388, %v390
    %v405 = vsel %vm403, %v392, %v394
    %v406 = vsel %vm403, %v396, %v398
    %v407 = vsel %vm403, %v400, %v402
    %v420 = vsel %vm403, %v390, %v388
    %v421 = vsel %vm403, %v394, %v392
    %v422 = vsel %vm403, %v398, %v396
    %v423 = vsel %vm403, %v402, %v400
    %s424 = scalar_lea.vmem %s1, 12
    %v425 = vld [vmem:[%s424] sm:$0x3]
    %v427 = vlaneseq
    %v428 = vshrl.u32 %v427, 7
    %v429 = vsub.s32 0, %v428
    %v430 = vrot.slane %v425, %v429
    %v431 = vlaneseq
    %v432 = vshrl.u32 %v431, 7
    %v433 = vsub.s32 1, %v432
    %v434 = vrot.slane %v425, %v433
    %v437 = vmul.f32 %v404, %v430
    %v438 = vmul.f32 %v420, %v434
    %v439 = vmul.f32 %v405, %v430
    %v440 = vmul.f32 %v421, %v434
    %v441 = vmul.f32 %v406, %v430
    %v442 = vmul.f32 %v422, %v434
    %v443 = vmul.f32 %v407, %v430
    %v444 = vmul.f32 %v423, %v434
    %v445 = vpack.c.bf16 %v439, %v437
    %v446 = vpack.c.bf16 %v440, %v438
    %v447 = vpack.c.bf16 %v443, %v441
    %v448 = vpack.c.bf16 %v444, %v442
    %v449 = vld [vmem:[#allocation5] sm:$0xff]
    %v450 = vld [vmem:[#allocation5 + $0x8] sm:$0xff]
    %v451 = vld [vmem:[#allocation5 + $0x10] sm:$0xff]
    %v452 = vld [vmem:[#allocation5 + $0x18] sm:$0xff]
    %v453 = vld [vmem:[#allocation5 + $0x20] sm:$0xff]
    %v454 = vld [vmem:[#allocation5 + $0x28] sm:$0xff]
    %v455 = vld [vmem:[#allocation5 + $0x30] sm:$0xff]
    %v456 = vld [vmem:[#allocation5 + $0x38] sm:$0xff]
    %v457 = vld [vmem:[%s4] sm:$0xff]
    %v458 = vld [vmem:[%s4 + $0x8] sm:$0xff]
    %v459 = vld [vmem:[%s4 + $0x10] sm:$0xff]
    %v460 = vld [vmem:[%s4 + $0x18] sm:$0xff]
    %v461 = vld [vmem:[%s4 + $0x20] sm:$0xff]
    %v462 = vld [vmem:[%s4 + $0x28] sm:$0xff]
    %v463 = vld [vmem:[%s4 + $0x30] sm:$0xff]
    %v464 = vld [vmem:[%s4 + $0x38] sm:$0xff]
    %466 = vset.pattern.permute.xlu0 0
    %467 = vperm.xlu0 %466, %v457
    %v468 = vpop.permute.xlu0 %467
    %471 = vset.pattern.permute.xlu0 0
    %472 = vperm.xlu0 %471, %v458
    %v473 = vpop.permute.xlu0 %472
    %476 = vset.pattern.permute.xlu0 0
    %477 = vperm.xlu0 %476, %v459
    %v478 = vpop.permute.xlu0 %477
    %481 = vset.pattern.permute.xlu0 0
    %482 = vperm.xlu0 %481, %v460
    %v483 = vpop.permute.xlu0 %482
    %486 = vset.pattern.permute.xlu0 0
    %487 = vperm.xlu0 %486, %v461
    %v488 = vpop.permute.xlu0 %487
    %491 = vset.pattern.permute.xlu0 0
    %492 = vperm.xlu0 %491, %v462
    %v493 = vpop.permute.xlu0 %492
    %496 = vset.pattern.permute.xlu0 0
    %497 = vperm.xlu0 %496, %v463
    %v498 = vpop.permute.xlu0 %497
    %501 = vset.pattern.permute.xlu0 0
    %502 = vperm.xlu0 %501, %v464
    %v503 = vpop.permute.xlu0 %502
    %v513 = vunpack.c.l.b16 %v449
    %v514 = vunpack.c.h.b16 %v449
    %v515 = vunpack.c.l.b16 %v450
    %v516 = vunpack.c.h.b16 %v450
    %v517 = vunpack.c.l.b16 %v451
    %v518 = vunpack.c.h.b16 %v451
    %v519 = vunpack.c.l.b16 %v452
    %v520 = vunpack.c.h.b16 %v452
    %v521 = vunpack.c.l.b16 %v453
    %v522 = vunpack.c.h.b16 %v453
    %v523 = vunpack.c.l.b16 %v454
    %v524 = vunpack.c.h.b16 %v454
    %v525 = vunpack.c.l.b16 %v455
    %v526 = vunpack.c.h.b16 %v455
    %v527 = vunpack.c.l.b16 %v456
    %v528 = vunpack.c.h.b16 %v456
    %v529 = vpack.c.b16 %v515, %v513
    %v530 = vpack.c.b16 %v516, %v514
    %v531 = vpack.c.b16 %v519, %v517
    %v532 = vpack.c.b16 %v520, %v518
    %v533 = vpack.c.b16 %v523, %v521
    %v534 = vpack.c.b16 %v524, %v522
    %v535 = vpack.c.b16 %v527, %v525
    %v536 = vpack.c.b16 %v528, %v526
    %vm541 = vcmask 785408
    %v543 = vsel %vm541, %v530, 0
    %v546 = vsel %vm541, %v532, 0
    %v549 = vsel %vm541, %v534, 0
    %v552 = vsel %vm541, %v536, 0
    %554 = vmatprep.subr.bf16.mxu0 %v262
    %555 = vmatpush1.bf16.msra.mxu0 %v261
    %556 = vmatprep.subr.bf16.mxu0 %v260
    %557 = vmatpush1.bf16.msra.mxu0 %v259
    %558 = vmatprep.subr.bf16.mxu0 %v258
    %559 = vmatpush1.bf16.msra.mxu0 %v257
    %560 = vmatprep.subr.bf16.mxu0 %v256
    %561 = vmatpush1.bf16.msra.mxu0 %v255
    %562 = vmatprep.subr.bf16.mxu0 %v196
    %563 = vmatpush1.bf16.msra.mxu0 %v195
    %564 = vmatprep.subr.bf16.mxu0 %v194
    %565 = vmatpush1.bf16.msra.mxu0 %v193
    %566 = vmatprep.subr.bf16.mxu0 %v134
    %567 = vmatpush1.bf16.msra.mxu0 %v133
    %568 = vmatprep.subr.bf16.mxu0 %v132
    %569 = vmatpush1.bf16.msra.mxu0 %v131
    %570 = vmatprep.subr.bf16.mxu0 0
    %571 = vmatpush2.bf16.msra.mxu0 0
    %572 = vmatprep.subr.bf16.mxu0 0
    %573 = vmatpush2.bf16.msra.mxu0 0
    %574 = vmatprep.subr.bf16.mxu0 %v448
    %575 = vmatpush2.bf16.msra.mxu0 %v447
    %576 = vmatprep.subr.bf16.mxu0 %v446
    %577 = vmatpush2.bf16.msra.mxu0 %v445
    %578 = vmatprep.subr.bf16.mxu0 %v386
    %579 = vmatpush2.bf16.msra.mxu0 %v385
    %580 = vmatprep.subr.bf16.mxu0 %v384
    %581 = vmatpush2.bf16.msra.mxu0 %v383
    %582 = vmatprep.subr.bf16.mxu0 %v324
    %583 = vmatpush2.bf16.msra.mxu0 %v323
    %584 = vmatprep.subr.bf16.mxu0 %v322
    %585 = vmatpush2.bf16.msra.mxu0 %v321
    %586 = vmatprep.mubr.bf16.mxu0 %v543
    %587 = vmatmul.mubr.bf16.gmra.mxu0 %v529
    %v588 = vpop.f32.mrf.mxu0
    %v589 = vadd.f32 %v468, %v588
    %v590 = vpop.f32.mrf.mxu0
    %v591 = vadd.f32 %v468, %v590
    %v592 = vpop.f32.mrf.mxu0
    %v593 = vadd.f32 %v473, %v592
    %v594 = vpop.f32.mrf.mxu0
    %v595 = vadd.f32 %v473, %v594
    %596 = vmatprep.mubr.bf16.mxu0 %v546
    %597 = vmatmul.mubr.bf16.gmra.mxu0 %v531
    %v598 = vpop.f32.mrf.mxu0
    %v599 = vadd.f32 %v478, %v598
    %v600 = vpop.f32.mrf.mxu0
    %v601 = vadd.f32 %v478, %v600
    %v602 = vpop.f32.mrf.mxu0
    %v603 = vadd.f32 %v483, %v602
    %v604 = vpop.f32.mrf.mxu0
    %v605 = vadd.f32 %v483, %v604
    %606 = vmatprep.mubr.bf16.mxu0 %v549
    %607 = vmatmul.mubr.bf16.gmra.mxu0 %v533
    %v608 = vpop.f32.mrf.mxu0
    %v609 = vadd.f32 %v488, %v608
    %v610 = vpop.f32.mrf.mxu0
    %v611 = vadd.f32 %v488, %v610
    %v612 = vpop.f32.mrf.mxu0
    %v613 = vadd.f32 %v493, %v612
    %v614 = vpop.f32.mrf.mxu0
    %v615 = vadd.f32 %v493, %v614
    %616 = vmatprep.mubr.bf16.mxu0 %v552
    %617 = vmatmul.mubr.bf16.gmra.mxu0 %v535
    %v618 = vpop.f32.mrf.mxu0
    %v619 = vadd.f32 %v498, %v618
    %v620 = vpop.f32.mrf.mxu0
    %v621 = vadd.f32 %v498, %v620
    %v622 = vpop.f32.mrf.mxu0
    %v623 = vadd.f32 %v503, %v622
    %v624 = vpop.f32.mrf.mxu0
    %v625 = vadd.f32 %v503, %v624
    %626 = vdwg.mxu0
    %v627 = vtanh.pop %v589
    %v628 = vtanh.pop %v591
    %v629 = vtanh.pop %v593
    %v630 = vtanh.pop %v595
    %v631 = vtanh.pop %v599
    %v632 = vtanh.pop %v601
    %v633 = vtanh.pop %v603
    %v634 = vtanh.pop %v605
    %v635 = vxor.u32 %v609, 2147483648
    %v636 = vxor.u32 %v611, 2147483648
    %v637 = vxor.u32 %v613, 2147483648
    %v638 = vxor.u32 %v615, 2147483648
    %v639 = vxor.u32 %v619, 2147483648
    %v640 = vxor.u32 %v621, 2147483648
    %v641 = vxor.u32 %v623, 2147483648
    %v642 = vxor.u32 %v625, 2147483648
    %v643 = vmul.f32 %v635, 1.442695
    %v644 = vpow.pop %v643
    %v645 = vmul.f32 %v636, 1.442695
    %v646 = vpow.pop %v645
    %v647 = vmul.f32 %v637, 1.442695
    %v648 = vpow.pop %v647
    %v649 = vmul.f32 %v638, 1.442695
    %v650 = vpow.pop %v649
    %v651 = vmul.f32 %v639, 1.442695
    %v652 = vpow.pop %v651
    %v653 = vmul.f32 %v640, 1.442695
    %v654 = vpow.pop %v653
    %v655 = vmul.f32 %v641, 1.442695
    %v656 = vpow.pop %v655
    %v657 = vmul.f32 %v642, 1.442695
    %v658 = vpow.pop %v657
    %v659 = vadd.f32 %v644, 1.0
    %v660 = vadd.f32 %v646, 1.0
    %v661 = vadd.f32 %v648, 1.0
    %v662 = vadd.f32 %v650, 1.0
    %v663 = vadd.f32 %v652, 1.0
    %v664 = vadd.f32 %v654, 1.0
    %v665 = vadd.f32 %v656, 1.0
    %v666 = vadd.f32 %v658, 1.0
    %v667 = vrcp.pop %v659
    %v668 = vmul.f32 1.0, %v667
    %v669 = vrcp.pop %v660
    %v670 = vmul.f32 1.0, %v669
    %v671 = vrcp.pop %v661
    %v672 = vmul.f32 1.0, %v671
    %v673 = vrcp.pop %v662
    %v674 = vmul.f32 1.0, %v673
    %v675 = vrcp.pop %v663
    %v676 = vmul.f32 1.0, %v675
    %v677 = vrcp.pop %v664
    %v678 = vmul.f32 1.0, %v677
    %v679 = vrcp.pop %v665
    %v680 = vmul.f32 1.0, %v679
    %v681 = vrcp.pop %v666
    %v682 = vmul.f32 1.0, %v681
    %v683 = vmul.f32 %v627, %v668
    %v684 = vmul.f32 %v628, %v670
    %v685 = vmul.f32 %v629, %v672
    %v686 = vmul.f32 %v630, %v674
    %v687 = vmul.f32 %v631, %v676
    %v688 = vmul.f32 %v632, %v678
    %v689 = vmul.f32 %v633, %v680
    %v690 = vmul.f32 %v634, %v682
    %v691 = vpack.c.bf16 %v685, %v683
    %v692 = vpack.c.bf16 %v686, %v684
    %v693 = vpack.c.bf16 %v689, %v687
    %v694 = vpack.c.bf16 %v690, %v688
    %v695 = vld [vmem:[#allocation2] sm:$0xf]
    %v696 = vld [vmem:[#allocation2 + $0x4] sm:$0xf]
    %v697 = vld [vmem:[#allocation2 + $0x8] sm:$0xf]
    %v698 = vld [vmem:[#allocation2 + $0xc] sm:$0xf]
    %v699 = vld [vmem:[#allocation2 + $0x10] sm:$0xf]
    %v700 = vld [vmem:[#allocation2 + $0x14] sm:$0xf]
    %v701 = vld [vmem:[#allocation2 + $0x18] sm:$0xf]
    %v702 = vld [vmem:[#allocation2 + $0x1c] sm:$0xf]
    %v703 = vld [vmem:[#allocation2 + $0x20] sm:$0xf]
    %v704 = vld [vmem:[#allocation2 + $0x24] sm:$0xf]
    %v705 = vld [vmem:[#allocation2 + $0x28] sm:$0xf]
    %v706 = vld [vmem:[#allocation2 + $0x2c] sm:$0xf]
    %v707 = vld [vmem:[#allocation2 + $0x30] sm:$0xf]
    %v708 = vld [vmem:[#allocation2 + $0x34] sm:$0xf]
    %v709 = vld [vmem:[#allocation2 + $0x38] sm:$0xf]
    %v710 = vld [vmem:[#allocation2 + $0x3c] sm:$0xf]
    %v727 = vunpack.c.l.b16 %v695
    %v728 = vunpack.c.l.b16 %v696
    %v729 = vunpack.c.l.b16 %v697
    %v730 = vunpack.c.l.b16 %v698
    %v731 = vunpack.c.l.b16 %v699
    %v732 = vunpack.c.l.b16 %v700
    %v733 = vunpack.c.l.b16 %v701
    %v734 = vunpack.c.l.b16 %v702
    %v735 = vunpack.c.l.b16 %v703
    %v736 = vunpack.c.l.b16 %v704
    %v737 = vunpack.c.l.b16 %v705
    %v738 = vunpack.c.l.b16 %v706
    %v739 = vunpack.c.l.b16 %v707
    %v740 = vunpack.c.l.b16 %v708
    %v741 = vunpack.c.l.b16 %v709
    %v742 = vunpack.c.l.b16 %v710
    %v743 = vpack.c.b16 %v728, %v727
    %v744 = vpack.c.b16 %v730, %v729
    %v745 = vpack.c.b16 %v732, %v731
    %v746 = vpack.c.b16 %v734, %v733
    %v747 = vpack.c.b16 %v736, %v735
    %v748 = vpack.c.b16 %v738, %v737
    %v749 = vpack.c.b16 %v740, %v739
    %v750 = vpack.c.b16 %v742, %v741
    %759 = vmatprep.subr.bf16.mxu0 0
    %760 = vmatpush1.bf16.msra.mxu0 %v750
    %761 = vmatprep.subr.bf16.mxu0 0
    %762 = vmatpush1.bf16.msra.mxu0 %v749
    %763 = vmatprep.subr.bf16.mxu0 0
    %764 = vmatpush1.bf16.msra.mxu0 %v748
    %765 = vmatprep.subr.bf16.mxu0 0
    %766 = vmatpush1.bf16.msra.mxu0 %v747
    %767 = vmatprep.subr.bf16.mxu0 0
    %768 = vmatpush1.bf16.msra.mxu0 %v746
    %769 = vmatprep.subr.bf16.mxu0 0
    %770 = vmatpush1.bf16.msra.mxu0 %v745
    %771 = vmatprep.subr.bf16.mxu0 0
    %772 = vmatpush1.bf16.msra.mxu0 %v744
    %773 = vmatprep.subr.bf16.mxu0 0
    %774 = vmatpush1.bf16.msra.mxu0 %v743
    %775 = vmatprep.subr.bf16.mxu0 0
    %776 = vmatpush2.bf16.msra.mxu0 0
    %777 = vmatprep.subr.bf16.mxu0 0
    %778 = vmatpush2.bf16.msra.mxu0 0
    %779 = vmatprep.subr.bf16.mxu0 0
    %780 = vmatpush2.bf16.msra.mxu0 0
    %781 = vmatprep.subr.bf16.mxu0 0
    %782 = vmatpush2.bf16.msra.mxu0 0
    %783 = vmatprep.subr.bf16.mxu0 0
    %784 = vmatpush2.bf16.msra.mxu0 0
    %785 = vmatprep.subr.bf16.mxu0 0
    %786 = vmatpush2.bf16.msra.mxu0 0
    %787 = vmatprep.subr.bf16.mxu0 0
    %788 = vmatpush2.bf16.msra.mxu0 0
    %789 = vmatprep.subr.bf16.mxu0 0
    %790 = vmatpush2.bf16.msra.mxu0 0
    %791 = vmatprep.mubr.bf16.mxu0 0
    %792 = vmatmul.mubr.bf16.gmra.mxu0 %v691
    %v793 = vpop.f32.mrf.mxu0
    %v794 = vadd.f32 0.0, %v793
    %v795 = vpop.f32.mrf.mxu0
    %v796 = vpop.f32.mrf.mxu0
    %v797 = vadd.f32 0.0, %v796
    %v798 = vpop.f32.mrf.mxu0
    %799 = vmatprep.mubr.bf16.mxu0 0
    %800 = vmatmul.mubr.bf16.gmra.mxu0 %v693
    %v801 = vpop.f32.mrf.mxu0
    %v802 = vadd.f32 0.0, %v801
    %v803 = vpop.f32.mrf.mxu0
    %v804 = vpop.f32.mrf.mxu0
    %v805 = vadd.f32 0.0, %v804
    %v806 = vpop.f32.mrf.mxu0
    %807 = vdwg.mxu0
    %v808 = vpack.c.bf16 %v797, %v794
    %v809 = vpack.c.bf16 %v805, %v802
    %810 = vmatprep.subr.bf16.mxu0 0
    %811 = vmatpush1.bf16.msra.mxu0 %v750
    %812 = vmatprep.subr.bf16.mxu0 0
    %813 = vmatpush1.bf16.msra.mxu0 %v749
    %814 = vmatprep.subr.bf16.mxu0 0
    %815 = vmatpush1.bf16.msra.mxu0 %v748
    %816 = vmatprep.subr.bf16.mxu0 0
    %817 = vmatpush1.bf16.msra.mxu0 %v747
    %818 = vmatprep.subr.bf16.mxu0 0
    %819 = vmatpush1.bf16.msra.mxu0 %v746
    %820 = vmatprep.subr.bf16.mxu0 0
    %821 = vmatpush1.bf16.msra.mxu0 %v745
    %822 = vmatprep.subr.bf16.mxu0 0
    %823 = vmatpush1.bf16.msra.mxu0 %v744
    %824 = vmatprep.subr.bf16.mxu0 0
    %825 = vmatpush1.bf16.msra.mxu0 %v743
    %826 = vmatprep.subr.bf16.mxu0 0
    %827 = vmatpush2.bf16.msra.mxu0 0
    %828 = vmatprep.subr.bf16.mxu0 0
    %829 = vmatpush2.bf16.msra.mxu0 0
    %830 = vmatprep.subr.bf16.mxu0 0
    %831 = vmatpush2.bf16.msra.mxu0 0
    %832 = vmatprep.subr.bf16.mxu0 0
    %833 = vmatpush2.bf16.msra.mxu0 0
    %834 = vmatprep.subr.bf16.mxu0 0
    %835 = vmatpush2.bf16.msra.mxu0 0
    %836 = vmatprep.subr.bf16.mxu0 0
    %837 = vmatpush2.bf16.msra.mxu0 0
    %838 = vmatprep.subr.bf16.mxu0 0
    %839 = vmatpush2.bf16.msra.mxu0 0
    %840 = vmatprep.subr.bf16.mxu0 0
    %841 = vmatpush2.bf16.msra.mxu0 0
    %842 = vmatprep.mubr.bf16.mxu0 0
    %843 = vmatmul.mubr.bf16.gmra.mxu0 %v808
    %v844 = vpop.f32.mrf.mxu0
    %v845 = vadd.f32 0.0, %v844
    %v846 = vpop.f32.mrf.mxu0
    %v847 = vpop.f32.mrf.mxu0
    %v848 = vadd.f32 0.0, %v847
    %v849 = vpop.f32.mrf.mxu0
    %850 = vmatprep.mubr.bf16.mxu0 0
    %851 = vmatmul.mubr.bf16.gmra.mxu0 %v809
    %v852 = vpop.f32.mrf.mxu0
    %v853 = vadd.f32 0.0, %v852
    %v854 = vpop.f32.mrf.mxu0
    %v855 = vpop.f32.mrf.mxu0
    %v856 = vadd.f32 0.0, %v855
    %v857 = vpop.f32.mrf.mxu0
    %858 = vdwg.mxu0
    %v859 = vpack.c.bf16 %v848, %v845
    %v860 = vpack.c.bf16 %v856, %v853
    %s861 = scalar_lea.vmem [#allocation2], 64
    %v862 = vld [vmem:[%s861] sm:$0xf]
    %v863 = vld [vmem:[%s861 + $0x4] sm:$0xf]
    %v864 = vld [vmem:[%s861 + $0x8] sm:$0xf]
    %v865 = vld [vmem:[%s861 + $0xc] sm:$0xf]
    %v866 = vld [vmem:[%s861 + $0x10] sm:$0xf]
    %v867 = vld [vmem:[%s861 + $0x14] sm:$0xf]
    %v868 = vld [vmem:[%s861 + $0x18] sm:$0xf]
    %v869 = vld [vmem:[%s861 + $0x1c] sm:$0xf]
    %v870 = vld [vmem:[%s861 + $0x20] sm:$0xf]
    %v871 = vld [vmem:[%s861 + $0x24] sm:$0xf]
    %v872 = vld [vmem:[%s861 + $0x28] sm:$0xf]
    %v873 = vld [vmem:[%s861 + $0x2c] sm:$0xf]
    %v874 = vld [vmem:[%s861 + $0x30] sm:$0xf]
    %v875 = vld [vmem:[%s861 + $0x34] sm:$0xf]
    %v876 = vld [vmem:[%s861 + $0x38] sm:$0xf]
    %v877 = vld [vmem:[%s861 + $0x3c] sm:$0xf]
    %v894 = vunpack.c.l.b16 %v862
    %v895 = vunpack.c.l.b16 %v863
    %v896 = vunpack.c.l.b16 %v864
    %v897 = vunpack.c.l.b16 %v865
    %v898 = vunpack.c.l.b16 %v866
    %v899 = vunpack.c.l.b16 %v867
    %v900 = vunpack.c.l.b16 %v868
    %v901 = vunpack.c.l.b16 %v869
    %v902 = vunpack.c.l.b16 %v870
    %v903 = vunpack.c.l.b16 %v871
    %v904 = vunpack.c.l.b16 %v872
    %v905 = vunpack.c.l.b16 %v873
    %v906 = vunpack.c.l.b16 %v874
    %v907 = vunpack.c.l.b16 %v875
    %v908 = vunpack.c.l.b16 %v876
    %v909 = vunpack.c.l.b16 %v877
    %v910 = vpack.c.b16 %v895, %v894
    %v911 = vpack.c.b16 %v897, %v896
    %v912 = vpack.c.b16 %v899, %v898
    %v913 = vpack.c.b16 %v901, %v900
    %v914 = vpack.c.b16 %v903, %v902
    %v915 = vpack.c.b16 %v905, %v904
    %v916 = vpack.c.b16 %v907, %v906
    %v917 = vpack.c.b16 %v909, %v908
    %926 = vmatprep.subr.bf16.mxu0 0
    %927 = vmatpush1.bf16.msra.mxu0 %v917
    %928 = vmatprep.subr.bf16.mxu0 0
    %929 = vmatpush1.bf16.msra.mxu0 %v916
    %930 = vmatprep.subr.bf16.mxu0 0
    %931 = vmatpush1.bf16.msra.mxu0 %v915
    %932 = vmatprep.subr.bf16.mxu0 0
    %933 = vmatpush1.bf16.msra.mxu0 %v914
    %934 = vmatprep.subr.bf16.mxu0 0
    %935 = vmatpush1.bf16.msra.mxu0 %v913
    %936 = vmatprep.subr.bf16.mxu0 0
    %937 = vmatpush1.bf16.msra.mxu0 %v912
    %938 = vmatprep.subr.bf16.mxu0 0
    %939 = vmatpush1.bf16.msra.mxu0 %v911
    %940 = vmatprep.subr.bf16.mxu0 0
    %941 = vmatpush1.bf16.msra.mxu0 %v910
    %942 = vmatprep.subr.bf16.mxu0 0
    %943 = vmatpush2.bf16.msra.mxu0 0
    %944 = vmatprep.subr.bf16.mxu0 0
    %945 = vmatpush2.bf16.msra.mxu0 0
    %946 = vmatprep.subr.bf16.mxu0 0
    %947 = vmatpush2.bf16.msra.mxu0 0
    %948 = vmatprep.subr.bf16.mxu0 0
    %949 = vmatpush2.bf16.msra.mxu0 0
    %950 = vmatprep.subr.bf16.mxu0 0
    %951 = vmatpush2.bf16.msra.mxu0 0
    %952 = vmatprep.subr.bf16.mxu0 0
    %953 = vmatpush2.bf16.msra.mxu0 0
    %954 = vmatprep.subr.bf16.mxu0 0
    %955 = vmatpush2.bf16.msra.mxu0 0
    %956 = vmatprep.subr.bf16.mxu0 0
    %957 = vmatpush2.bf16.msra.mxu0 0
    %958 = vmatprep.mubr.bf16.mxu0 0
    %959 = vmatmul.mubr.bf16.gmra.mxu0 %v692
    %v960 = vpop.f32.mrf.mxu0
    %v961 = vadd.f32 0.0, %v960
    %v962 = vpop.f32.mrf.mxu0
    %v963 = vpop.f32.mrf.mxu0
    %v964 = vadd.f32 0.0, %v963
    %v965 = vpop.f32.mrf.mxu0
    %966 = vmatprep.mubr.bf16.mxu0 0
    %967 = vmatmul.mubr.bf16.gmra.mxu0 %v694
    %v968 = vpop.f32.mrf.mxu0
    %v969 = vadd.f32 0.0, %v968
    %v970 = vpop.f32.mrf.mxu0
    %v971 = vpop.f32.mrf.mxu0
    %v972 = vadd.f32 0.0, %v971
    %v973 = vpop.f32.mrf.mxu0
    %974 = vdwg.mxu0
    %v975 = vpack.c.bf16 %v964, %v961
    %v976 = vpack.c.bf16 %v972, %v969
    %977 = vmatprep.subr.bf16.mxu0 0
    %978 = vmatpush1.bf16.msra.mxu0 %v917
    %979 = vmatprep.subr.bf16.mxu0 0
    %980 = vmatpush1.bf16.msra.mxu0 %v916
    %981 = vmatprep.subr.bf16.mxu0 0
    %982 = vmatpush1.bf16.msra.mxu0 %v915
    %983 = vmatprep.subr.bf16.mxu0 0
    %984 = vmatpush1.bf16.msra.mxu0 %v914
    %985 = vmatprep.subr.bf16.mxu0 0
    %986 = vmatpush1.bf16.msra.mxu0 %v913
    %987 = vmatprep.subr.bf16.mxu0 0
    %988 = vmatpush1.bf16.msra.mxu0 %v912
    %989 = vmatprep.subr.bf16.mxu0 0
    %990 = vmatpush1.bf16.msra.mxu0 %v911
    %991 = vmatprep.subr.bf16.mxu0 0
    %992 = vmatpush1.bf16.msra.mxu0 %v910
    %993 = vmatprep.subr.bf16.mxu0 0
    %994 = vmatpush2.bf16.msra.mxu0 0
    %995 = vmatprep.subr.bf16.mxu0 0
    %996 = vmatpush2.bf16.msra.mxu0 0
    %997 = vmatprep.subr.bf16.mxu0 0
    %998 = vmatpush2.bf16.msra.mxu0 0
    %999 = vmatprep.subr.bf16.mxu0 0
    %1000 = vmatpush2.bf16.msra.mxu0 0
    %1001 = vmatprep.subr.bf16.mxu0 0
    %1002 = vmatpush2.bf16.msra.mxu0 0
    %1003 = vmatprep.subr.bf16.mxu0 0
    %1004 = vmatpush2.bf16.msra.mxu0 0
    %1005 = vmatprep.subr.bf16.mxu0 0
    %1006 = vmatpush2.bf16.msra.mxu0 0
    %1007 = vmatprep.subr.bf16.mxu0 0
    %1008 = vmatpush2.bf16.msra.mxu0 0
    %1009 = vmatprep.mubr.bf16.mxu0 0
    %1010 = vmatmul.mubr.bf16.gmra.mxu0 %v975
    %v1011 = vpop.f32.mrf.mxu0
    %v1012 = vadd.f32 0.0, %v1011
    %v1013 = vpop.f32.mrf.mxu0
    %v1014 = vpop.f32.mrf.mxu0
    %v1015 = vadd.f32 0.0, %v1014
    %v1016 = vpop.f32.mrf.mxu0
    %1017 = vmatprep.mubr.bf16.mxu0 0
    %1018 = vmatmul.mubr.bf16.gmra.mxu0 %v976
    %v1019 = vpop.f32.mrf.mxu0
    %v1020 = vadd.f32 0.0, %v1019
    %v1021 = vpop.f32.mrf.mxu0
    %v1022 = vpop.f32.mrf.mxu0
    %v1023 = vadd.f32 0.0, %v1022
    %v1024 = vpop.f32.mrf.mxu0
    %1025 = vdwg.mxu0
    %v1026 = vpack.c.bf16 %v1015, %v1012
    %v1027 = vpack.c.bf16 %v1023, %v1020
    %v1028 = vld [vmem:[%s5] sm:$0xf]
    %v1029 = vld [vmem:[%s5 + $0x4] sm:$0xf]
    %v1030 = vld [vmem:[%s5 + $0x8] sm:$0xf]
    %v1031 = vld [vmem:[%s5 + $0xc] sm:$0xf]
    %v1032 = vld [vmem:[%s6] sm:$0xff]
    %v1033 = vld [vmem:[%s6 + $0x8] sm:$0xff]
    %v1034 = vld [vmem:[%s6 + $0x10] sm:$0xff]
    %v1035 = vld [vmem:[%s6 + $0x18] sm:$0xff]
    %1037 = vset.pattern.permute.xlu0 0
    %1038 = vperm.xlu0 %1037, %v1032
    %v1039 = vpop.permute.xlu0 %1038
    %1042 = vset.pattern.permute.xlu0 0
    %1043 = vperm.xlu0 %1042, %v1033
    %v1044 = vpop.permute.xlu0 %1043
    %1047 = vset.pattern.permute.xlu0 0
    %1048 = vperm.xlu0 %1047, %v1034
    %v1049 = vpop.permute.xlu0 %1048
    %1052 = vset.pattern.permute.xlu0 0
    %1053 = vperm.xlu0 %1052, %v1035
    %v1054 = vpop.permute.xlu0 %1053
    %v1060 = vunpack.c.l.b16 %v1028
    %v1061 = vunpack.c.l.b16 %v1029
    %v1062 = vunpack.c.l.b16 %v1030
    %v1063 = vunpack.c.l.b16 %v1031
    %v1064 = vpack.c.b16 %v1061, %v1060
    %v1065 = vpack.c.b16 %v1063, %v1062
    %v1067 = vsel %vm541, %v1064, 0
    %v1070 = vsel %vm541, %v1065, 0
    %1072 = vmatprep.subr.bf16.mxu0 0
    %1073 = vmatpush1.bf16.msra.mxu0 0
    %1074 = vmatprep.subr.bf16.mxu0 0
    %1075 = vmatpush1.bf16.msra.mxu0 0
    %1076 = vmatprep.subr.bf16.mxu0 %v1027
    %1077 = vmatpush1.bf16.msra.mxu0 %v860
    %1078 = vmatprep.subr.bf16.mxu0 %v1026
    %1079 = vmatpush1.bf16.msra.mxu0 %v859
    %1080 = vmatprep.subr.bf16.mxu0 %v976
    %1081 = vmatpush1.bf16.msra.mxu0 %v809
    %1082 = vmatprep.subr.bf16.mxu0 %v975
    %1083 = vmatpush1.bf16.msra.mxu0 %v808
    %1084 = vmatprep.subr.bf16.mxu0 %v694
    %1085 = vmatpush1.bf16.msra.mxu0 %v693
    %1086 = vmatprep.subr.bf16.mxu0 %v692
    %1087 = vmatpush1.bf16.msra.mxu0 %v691
    %1088 = vmatprep.subr.bf16.mxu0 0
    %1089 = vmatpush2.bf16.msra.mxu0 0
    %1090 = vmatprep.subr.bf16.mxu0 0
    %1091 = vmatpush2.bf16.msra.mxu0 0
    %1092 = vmatprep.subr.bf16.mxu0 0
    %1093 = vmatpush2.bf16.msra.mxu0 0
    %1094 = vmatprep.subr.bf16.mxu0 0
    %1095 = vmatpush2.bf16.msra.mxu0 0
    %1096 = vmatprep.subr.bf16.mxu0 0
    %1097 = vmatpush2.bf16.msra.mxu0 0
    %1098 = vmatprep.subr.bf16.mxu0 0
    %1099 = vmatpush2.bf16.msra.mxu0 0
    %1100 = vmatprep.subr.bf16.mxu0 0
    %1101 = vmatpush2.bf16.msra.mxu0 0
    %1102 = vmatprep.subr.bf16.mxu0 0
    %1103 = vmatpush2.bf16.msra.mxu0 0
    %1104 = vmatprep.mubr.bf16.mxu0 0
    %1105 = vmatmul.mubr.bf16.gmra.mxu0 %v1067
    %v1106 = vpop.f32.mrf.mxu0
    %v1107 = vadd.f32 %v1039, %v1106
    %v1108 = vpop.f32.mrf.mxu0
    %v1109 = vadd.f32 %v1039, %v1108
    %v1110 = vpop.f32.mrf.mxu0
    %v1111 = vadd.f32 %v1044, %v1110
    %v1112 = vpop.f32.mrf.mxu0
    %v1113 = vadd.f32 %v1044, %v1112
    %1114 = vmatprep.mubr.bf16.mxu0 0
    %1115 = vmatmul.mubr.bf16.gmra.mxu0 %v1070
    %v1116 = vpop.f32.mrf.mxu0
    %v1117 = vadd.f32 %v1049, %v1116
    %v1118 = vpop.f32.mrf.mxu0
    %v1119 = vadd.f32 %v1049, %v1118
    %v1120 = vpop.f32.mrf.mxu0
    %v1121 = vadd.f32 %v1054, %v1120
    %v1122 = vpop.f32.mrf.mxu0
    %v1123 = vadd.f32 %v1054, %v1122
    %1124 = vdwg.mxu0
    %v1125 = vadd.f32 %v1107, %v58
    %v1126 = vadd.f32 %v1109, %v59
    %v1127 = vadd.f32 %v1111, %v60
    %v1128 = vadd.f32 %v1113, %v61
    %v1129 = vadd.f32 %v1117, %v62
    %v1130 = vadd.f32 %v1119, %v63
    %v1131 = vadd.f32 %v1121, %v64
    %v1132 = vadd.f32 %v1123, %v65
    %1133 = vst [vmem:[#allocation7] sm:$0xff] %v1125
    %1134 = vst [vmem:[#allocation7 + $0x8] sm:$0xff] %v1126
    %1135 = vst [vmem:[#allocation7 + $0x10] sm:$0xff] %v1127
    %1136 = vst [vmem:[#allocation7 + $0x18] sm:$0xff] %v1128
    %1137 = vst [vmem:[#allocation7 + $0x20] sm:$0xff] %v1129
    %1138 = vst [vmem:[#allocation7 + $0x28] sm:$0xff] %v1130
    %1139 = vst [vmem:[#allocation7 + $0x30] sm:$0xff] %v1131
    %1140 = vst [vmem:[#allocation7 + $0x38] sm:$0xff] %v1132
    %v1141 = vadd.f32 %v1125, %v1126
    %1142 = vadd.xlane.f32.xlu0 %v1141
    %v1143 = vpop.xlane.xlu0 %1142
    %v1144 = vadd.f32 %v1127, %v1128
    %1145 = vadd.xlane.f32.xlu0 %v1144
    %v1146 = vpop.xlane.xlu0 %1145
    %v1147 = vadd.f32 %v1129, %v1130
    %1148 = vadd.xlane.f32.xlu0 %v1147
    %v1149 = vpop.xlane.xlu0 %1148
    %v1150 = vadd.f32 %v1131, %v1132
    %1151 = vadd.xlane.f32.xlu0 %v1150
    %v1152 = vpop.xlane.xlu0 %1151
    %v1153 = vmul.f32 %v1125, %v1125
    %v1154 = vmul.f32 %v1126, %v1126
    %v1155 = vmul.f32 %v1127, %v1127
    %v1156 = vmul.f32 %v1128, %v1128
    %v1157 = vmul.f32 %v1129, %v1129
    %v1158 = vmul.f32 %v1130, %v1130
    %v1159 = vmul.f32 %v1131, %v1131
    %v1160 = vmul.f32 %v1132, %v1132
    %v1161 = vadd.f32 %v1153, %v1154
    %1162 = vadd.xlane.f32.xlu0 %v1161
    %v1163 = vpop.xlane.xlu0 %1162
    %v1164 = vadd.f32 %v1155, %v1156
    %1165 = vadd.xlane.f32.xlu0 %v1164
    %v1166 = vpop.xlane.xlu0 %1165
    %v1167 = vadd.f32 %v1157, %v1158
    %1168 = vadd.xlane.f32.xlu0 %v1167
    %v1169 = vpop.xlane.xlu0 %1168
    %v1170 = vadd.f32 %v1159, %v1160
    %1171 = vadd.xlane.f32.xlu0 %v1170
    %v1172 = vpop.xlane.xlu0 %1171
    %v1173 = vsel %vm217, %v1143, %v1163
    %v1174 = vsel %vm217, %v1146, %v1166
    %v1175 = vsel %vm217, %v1149, %v1169
    %v1176 = vsel %vm217, %v1152, %v1172
    %1177 = vst.msk [vmem:[%s8] sm:$0xff] %vm155, %v1173
    %1178 = vst.msk [vmem:[%s8 + $0x8] sm:$0xff] %vm155, %v1174
    %1179 = vst.msk [vmem:[%s8 + $0x10] sm:$0xff] %vm155, %v1175
    %1180 = vst.msk [vmem:[%s8 + $0x18] sm:$0xff] %vm155, %v1176
    // Predicated region
    $region38: #{tpu_custom_call.1} parent=1 // pred_check
      _
    $region39: #{tpu_custom_call.1} parent=1 // pred_check_branch
      %1182 = sbr.rel (0) target = $region41
    $region40: #{tpu_custom_call.1} parent=1 // pred_region
      %s1184 = ssub.s32 1024, 1024
      %1185 = vsyncadd [#allocation4], %s1184
      %s1186 = sshll.u32 [#allocation7], 4
      %s1187 = int_to_ptr.vmem [resolvable:$true] %s1186
      %1192 = dma.vmem_to_hbm [thread:$0]  %s1187, 1024, %s7, [#allocation4], 256, 256, 16
    $region41: #{tpu_custom_call.1} parent=1 // pred_fallthru
      _
    // Predicated region
    $region42: #{tpu_custom_call.1} parent=1 // pred_check
      _
    $region43: #{tpu_custom_call.1} parent=1 // pred_check_branch
      %1194 = sbr.rel (0) target = $region45
    $region44: #{tpu_custom_call.1} parent=1 // pred_region
      _
    $region45: #{tpu_custom_call.1} parent=1 // pred_fallthru
      _
    // Predicated region
    $region46: #{tpu_custom_call.1} parent=1 // pred_check
      _
    $region47: #{tpu_custom_call.1} parent=1 // pred_check_branch
      %1196 = sbr.rel (0) target = $region49
    $region48: #{tpu_custom_call.1} parent=1 // pred_region
      %1197 = dma.done [#allocation4], 1024
    $region49: #{tpu_custom_call.1} parent=1 // pred_fallthru
      _
    // Predicated region
    $region50: #{tpu_custom_call.1} parent=1 // pred_check
      _
    $region51: #{tpu_custom_call.1} parent=1 // pred_check_branch
      %1199 = sbr.rel (0) target = $region53
    $region52: #{tpu_custom_call.1} parent=1 // pred_region
      _
    $region53: #{tpu_custom_call.1} parent=1 // pred_fallthru
      _
    %1200 = vsyncpa [#allocation3], 1
    %1201 = vsyncpa [#allocation6], 1
    %1202 = vsyncpa [#allocation4], 1

</llo_original>
